<compile_context>
chip_gen: v5e
topology: v5e:2x2
jax: 0.10.0
libtpu: 0.0.40
codegen_flags: <defaults>
</compile_context>

<pallas_src>
import numpy as np
import jax
import jax.numpy as jnp
from jax.experimental import pallas as pl
from jax.experimental.pallas import tpu as pltpu


_LANE = 128
_MAX_COLS = 4096  # lane-dense slab width cap (f32: 16 KiB per row)


def _identity_kernel(x_ref, o_ref):
    # Pure pass-through of the current VMEM tile.
    o_ref[...] = x_ref[...]


def _vmem_capacity_bytes() -> int:
    try:
        return int(pltpu.get_tpu_info().vmem_capacity_bytes)
    except Exception:
        return 64 << 20  # conservative floor (v7x); safe on every generation


_VMEM_BYTES = _vmem_capacity_bytes()
if _VMEM_BYTES >= (96 << 20):
    # v5e / v6e: 128 MiB physical VMEM. 8 MiB blocks amortize the ~0.35 us
    # per-grid-step overhead; 64 MiB scoped limit leaves ample headroom.
    _TARGET_BLOCK_BYTES = 8 << 20
    _VMEM_LIMIT_BYTES = 64 << 20
else:
    # v7x: 64 MiB physical VMEM, ~3.2 TB/s HBM. 8 MiB blocks keep per-step
    # overhead <10%; in+out double buffers = 32 MiB, under a 44 MiB limit.
    _TARGET_BLOCK_BYTES = 8 << 20
    _VMEM_LIMIT_BYTES = 44 << 20


def _sublane_granule(dtype) -> int:
    """Rows-per-sublane-tile for the dtype (8 f32, 16 bf16, 32 i8, 64 4-bit)."""
    d = jnp.dtype(dtype)
    bits = int(d.itemsize) * 8
    if d.name in ("int4", "uint4") or d.name.startswith("float4"):
        bits = 4  # itemsize reports 1 byte for sub-byte dtypes
    return max(8, 256 // bits)


def _choose_cols(n: int) -> int:
    """Column width for the lane-dense 2D slab (0 => no usable decomposition)."""
    # 1) Widest multiple of 128 dividing n: fully lane-dense, unmasked stores.
    c = min(_MAX_COLS, (n // _LANE) * _LANE)
    while c >= _LANE:
        if n % c == 0:
            return c
        c -= _LANE
    # 2) Widest divisor of n in [128, _MAX_COLS]: the block uses the full last
    #    dim (always legal); only the final vreg column is lane-padded.
    for c in range(min(n, _MAX_COLS), _LANE - 1, -1):
        if n % c == 0:
            return c
    # 3) Tiny input (n < 128): a single (1, n) full-dim block.
    if n < _LANE:
        return n
    return 0


@jax.jit
def transference_function(x: jax.Array) -> jax.Array:
    """Identity forward pass (y = x), executed on-TPU via a tiled Pallas copy."""
    orig_shape = x.shape
    dtype = x.dtype
    n = int(np.prod(orig_shape))
    if n == 0:
        return x

    flat = x.reshape(-1)  # contiguous reshape: free under jit

    cols = _choose_cols(n)
    padded = False
    if cols == 0:
        # Rare fallback (large n with no divisor >= 128, e.g. a large prime):
        # pad the <128-element tail, copy, slice back. Costs extra HBM passes,
        # but only for pathological sizes that admit no 2D decomposition.
        pad = (-n) % _LANE
        flat = jnp.pad(flat, (0, pad))
        cols = _choose_cols(n + pad)  # n + pad is a multiple of 128 -> cols >= 128
        padded = True

    n_work = flat.shape[0]
    rows = n_work // cols
    x2 = flat.reshape(rows, cols)

    itemsize = int(jnp.dtype(dtype).itemsize)
    granule = _sublane_granule(dtype)
    cols_padded = ((cols + _LANE - 1) // _LANE) * _LANE  # VMEM lane padding
    row_bytes = max(1, cols_padded * itemsize)

    # Rows per block: bytes-based, rounded down to the sublane granule.
    tm = max(granule, (_TARGET_BLOCK_BYTES // row_bytes) // granule * granule)

    # v7x has 2 TensorCores: keep at least 2 roughly balanced blocks whenever
    # rows allows, so dimension_semantics=("parallel",) can shard across them.
    if rows >= 2 * granule:
        half = (((rows + 1) // 2) + granule - 1) // granule * granule
        tm = min(tm, half)

    if tm >= rows:
        tm = rows  # single full-dim block along rows (always legal)
    grid = (pl.cdiv(rows, tm),)  # ragged last block handled by Pallas masking

    out2 = pl.pallas_call(
        _identity_kernel,
        out_shape=jax.ShapeDtypeStruct((rows, cols), dtype),
        grid=grid,
        in_specs=[pl.BlockSpec((tm, cols), lambda i: (i, 0))],
        out_specs=pl.BlockSpec((tm, cols), lambda i: (i, 0)),
        # No input_output_aliases: x is not donated by callers, so aliasing
        # would only trigger a defensive full copy of x before the kernel.
        compiler_params=pltpu.CompilerParams(
            dimension_semantics=("parallel",),
            vmem_limit_bytes=_VMEM_LIMIT_BYTES,
        ),
    )(x2)

    out_flat = out2.reshape(-1)
    if padded:
        out_flat = out_flat[:n]
    return out_flat.reshape(orig_shape)


if __name__ == "__main__":
    key = jax.random.PRNGKey(0)

    # Primary test: NCHW-style input (batch=2, channels=4, spatial=16x16).
    x = jax.random.normal(key, (2, 4, 16, 16), dtype=jnp.float32)
    y = transference_function(x)
    jax.block_until_ready(y)
    assert y.shape == x.shape and y.dtype == x.dtype
    assert bool(jnp.all(y == x))

    # Awkward size (n = 1155, not a multiple of 128): exercises the
    # full-dim-column path (no pad / no slice).
    x2 = jax.random.normal(key, (3, 5, 7, 11), dtype=jnp.float32)
    y2 = transference_function(x2)
    jax.block_until_ready(y2)
    assert y2.shape == x2.shape and bool(jnp.all(y2 == x2))

    # bf16 path (sublane granule 16).
    x3 = jax.random.normal(key, (2, 8, 32), dtype=jnp.bfloat16)
    y3 = transference_function(x3)
    jax.block_until_ready(y3)
    assert y3.shape == x3.shape and y3.dtype == x3.dtype and bool(jnp.all(y3 == x3))

    print("KERNEL_OK")
</pallas_src>

<mosaic_0001>
module attributes {stable_mosaic.version = 11 : i64} {
  func.func @_identity_kernel(%arg0: i32, %arg1: memref<1x2048xf32, #tpu.memory_space<vmem>>, %arg2: memref<1x2048xf32, #tpu.memory_space<vmem>>) attributes {dimension_semantics = [#tpu.dimension_semantics<parallel>], iteration_bounds = array<i64: 1>, scalar_prefetch = 0 : i64, scratch_operands = 0 : i64, tpu.core_type = #tpu.core_type<tc>, window_params = [{transform_indices = @transform_0, window_bounds = array<i64: 1, 2048>}, {transform_indices = @transform_1, window_bounds = array<i64: 1, 2048>}]} {
    %c0 = arith.constant 0 : index
    %c0_0 = arith.constant 0 : index
    %0 = vector.load %arg1[%c0, %c0_0] : memref<1x2048xf32, #tpu.memory_space<vmem>>, vector<1x2048xf32>
    %c0_1 = arith.constant 0 : index
    %c0_2 = arith.constant 0 : index
    %1 = vector.load %arg2[%c0_1, %c0_2] : memref<1x2048xf32, #tpu.memory_space<vmem>>, vector<1x2048xf32>
    tpu.vector_store %arg2[%c0_1, %c0_2], %0 {strides = array<i32>} : memref<1x2048xf32, #tpu.memory_space<vmem>>, vector<1x2048xf32>,
    return
  }
  func.func @transform_0(%arg0: i32) -> (i32, i32) {
    %c0_i32 = arith.constant 0 : i32
    %c0_i32_0 = arith.constant 0 : i32
    return %arg0, %c0_i32 : i32, i32
  }
  func.func @transform_1(%arg0: i32) -> (i32, i32) {
    %c0_i32 = arith.constant 0 : i32
    %c0_i32_0 = arith.constant 0 : i32
    return %arg0, %c0_i32 : i32, i32
  }
}

</mosaic_0001>

<llo_original>
// kernel: transference_function.1
$region0: #{transference_function.1}
  #allocation0 [shape = 'u32[]', space=smem, size = 0x4, offset = 0x4, fixed_abs, tag = 'smem constant byte address 0x4 - core index']
  #allocation1 [shape = 'u32[72,128]{1,0:T(1,128)}', space=vmem, size = 0x9000, scoped, tag = 'internal scratch']
  %s0 = inlined_call_operand.vmem [shape: f32[1,2048], index: 0, kind: input, shape index: {}]
  %s1 = inlined_call_operand.vmem [shape: f32[1,2048], index: 1, kind: output, shape index: {}]
  %s2 = sld [smem:[#allocation0]]
  $region14: #{transference_function.1} parent=0
    _
  %s4 = ssub.s32 1, %s2
  %s5 = scalar_select 0, %s4, %s2
  // Predicated region
  $region2: #{transference_function.1} parent=0 // pred_check
    _
  $region3: #{transference_function.1} parent=0 // pred_check_branch
    %7 = sbr.rel (0) target = $region5
  $region4: #{transference_function.1} parent=0 // pred_region
    _
  $region5: #{transference_function.1} parent=0 // pred_fallthru
    _
  %v8 = vld [vmem:[%s0] sm:$0xff]
  %v9 = vld [vmem:[%s0 + $0x8] sm:$0xff]
  %10 = vst [vmem:[%s1] sm:$0xff] %v8
  %11 = vst [vmem:[%s1 + $0x8] sm:$0xff] %v9
  // Predicated region
  $region6: #{transference_function.1} parent=0 // pred_check
    _
  $region7: #{transference_function.1} parent=0 // pred_check_branch
    %13 = sbr.rel (0) target = $region9
  $region8: #{transference_function.1} parent=0 // pred_region
    _
  $region9: #{transference_function.1} parent=0 // pred_fallthru
    _
  // Predicated region
  $region10: #{transference_function.1} parent=0 // pred_check
    _
  $region11: #{transference_function.1} parent=0 // pred_check_branch
    %15 = sbr.rel (0) target = $region13
  $region12: #{transference_function.1} parent=0 // pred_region
    _
  $region13: #{transference_function.1} parent=0 // pred_fallthru
    _

</llo_original>
